<compile_context>
chip_gen: v6e
topology: v6e:2x2x1
jax: 0.10.0
libtpu: 0.0.40
codegen_flags: <defaults>
</compile_context>

<pallas_src>
import jax
import jax.numpy as jnp
from jax.experimental import pallas as pl
from jax.experimental.pallas import tpu as pltpu


def _round_up(x, m):
    return ((x + m - 1) // m) * m


def mlp_classifier_kernel(x_ref, w1_ref, b1_ref, w2_ref, b2_ref, out_ref):
    # One batch tile per grid step; weights/biases are fully VMEM-resident.
    x = x_ref[...]                                              # (TB, D_in) bf16

    # Linear 1: bf16 operands on the MXU, f32 accumulate; bias+ReLU in f32 (VPU).
    h1 = jnp.dot(x, w1_ref[...], preferred_element_type=jnp.float32)
    h1 = jnp.maximum(h1 + b1_ref[...], 0.0)                     # (TB, H) f32

    # Linear 2: cast the activation to bf16 only for the MXU operand.
    logits = jnp.dot(h1.astype(w2_ref.dtype), w2_ref[...],
                     preferred_element_type=jnp.float32)
    logits = logits + b2_ref[...]                               # padded lanes -> -1e30

    # log_softmax along the (lane-dense, padded-to-128) class dim.
    # Padded logits are ~-1e30: they never win the max and exp() underflows to 0,
    # so the result over the real classes is exactly log_softmax(real_logits).
    m = jnp.max(logits, axis=-1, keepdims=True)
    shifted = logits - m
    lse = jnp.log(jnp.sum(jnp.exp(shifted), axis=-1, keepdims=True))
    out_ref[...] = (shifted - lse).astype(out_ref.dtype)


def mlp_classifier(x, w1, b1, w2, b2, *, tile_b=512):
    """x: (B, D_in); w1: (H, D_in); b1: (H,); w2: (C, H); b2: (C,).

    Weights come PyTorch-style (out_features, in_features); they are transposed,
    bf16-cast and class-padded once here (glue) so the kernel hot path is two
    plain MXU matmuls plus a lane-dense log_softmax.
    """
    x = jnp.asarray(x, jnp.float32)
    B, D_in = x.shape
    H = w1.shape[0]
    C = w2.shape[0]

    LANE, SUB = 128, 8
    C_pad = _round_up(max(C, LANE), LANE)

    # Large batch tile; for small B use the whole (8-rounded) batch in one step.
    # For large B this yields multiple "parallel" steps (good for v7x's 2 TCs).
    tb = min(tile_b, _round_up(B, SUB))
    B_pad = _round_up(B, tb)

    # ---- one-time parameter glue (hoist out of the hot path in real use) ----
    w1_t = jnp.asarray(w1, jnp.float32).T.astype(jnp.bfloat16)            # (D_in, H)
    b1_r = jnp.asarray(b1, jnp.float32).reshape(1, H)                     # (1, H) f32
    w2_t = (jnp.zeros((H, C_pad), jnp.float32)
            .at[:, :C].set(jnp.asarray(w2, jnp.float32).T)
            .astype(jnp.bfloat16))                                        # (H, C_pad)
    b2_r = (jnp.full((1, C_pad), -1e30, jnp.float32)
            .at[0, :C].set(jnp.asarray(b2, jnp.float32)))                 # (1, C_pad)
    x_pad = (jnp.zeros((B_pad, D_in), jnp.bfloat16)
             .at[:B].set(x.astype(jnp.bfloat16)))                         # (B_pad, D_in)

    grid = (B_pad // tb,)

    cost = pl.CostEstimate(
        flops=2 * B_pad * D_in * H + 2 * B_pad * H * C_pad,
        transcendentals=B_pad * C_pad + B_pad,                 # exp + log
        bytes_accessed=(x_pad.size * 2 + w1_t.size * 2 + w2_t.size * 2
                        + b1_r.size * 4 + b2_r.size * 4 + B_pad * C_pad * 4),
    )

    out = pl.pallas_call(
        mlp_classifier_kernel,
        out_shape=jax.ShapeDtypeStruct((B_pad, C_pad), jnp.float32),
        grid_spec=pltpu.PrefetchScalarGridSpec(
            num_scalar_prefetch=0,
            grid=grid,
            in_specs=[
                pl.BlockSpec((tb, D_in),   lambda i: (i, 0)),   # x batch tile (bf16)
                pl.BlockSpec((D_in, H),    lambda i: (0, 0)),   # W1^T, resident
                pl.BlockSpec((1, H),       lambda i: (0, 0)),   # b1
                pl.BlockSpec((H, C_pad),   lambda i: (0, 0)),   # W2^T (class-padded)
                pl.BlockSpec((1, C_pad),   lambda i: (0, 0)),   # b2  (padded = -1e30)
            ],
            out_specs=pl.BlockSpec((tb, C_pad), lambda i: (i, 0)),  # lane-dense store
        ),
        compiler_params=pltpu.CompilerParams(
            dimension_semantics=("parallel",),
            vmem_limit_bytes=32 * 1024 * 1024,
        ),
        cost_estimate=cost,
    )(x_pad, w1_t, b1_r, w2_t, b2_r)

    # Drop batch padding and padded classes.
    return out[:B, :C]


def _reference(x, w1, b1, w2, b2):
    h1 = jax.nn.relu(x @ w1.T + b1)
    logits = h1 @ w2.T + b2
    return jax.nn.log_softmax(logits, axis=1)


if __name__ == "__main__":
    # Small shapes consistent with the module's forward: x is (batch, input_size).
    # Batch deliberately NOT a multiple of the tile to exercise the padded grid.
    batch, input_size, hidden_size, num_class = 19, 32, 64, 10

    key = jax.random.PRNGKey(0)
    kx, kw1, kb1, kw2, kb2 = jax.random.split(key, 5)

    x = jax.random.normal(kx, (batch, input_size), dtype=jnp.float32)
    # Deterministic parameter init (synthetic; mirrors nn.Linear shapes).
    w1 = jax.random.normal(kw1, (hidden_size, input_size), dtype=jnp.float32) * 0.1
    b1 = jax.random.normal(kb1, (hidden_size,), dtype=jnp.float32) * 0.1
    w2 = jax.random.normal(kw2, (num_class, hidden_size), dtype=jnp.float32) * 0.1
    b2 = jax.random.normal(kb2, (num_class,), dtype=jnp.float32) * 0.1

    out = mlp_classifier(x, w1, b1, w2, b2)
    out = jax.block_until_ready(out)

    ref = _reference(x, w1, b1, w2, b2)
    assert out.shape == (batch, num_class)
    # bf16 MXU operands -> compare against the f32 reference with a bf16-scale tolerance.
    assert jnp.allclose(out, ref, atol=2e-2, rtol=2e-2), "mismatch vs reference"
    # Rows of log_softmax must exp-sum to 1 over the real classes only.
    assert jnp.allclose(jnp.sum(jnp.exp(out), axis=1), 1.0, atol=1e-3)

    print("KERNEL_OK")
</pallas_src>

<mosaic_0001>
module attributes {stable_mosaic.version = 11 : i64} {
  func.func @mlp_classifier_kernel(%arg0: i32, %arg1: memref<24x32xbf16, #tpu.memory_space<vmem>>, %arg2: memref<32x64xbf16, #tpu.memory_space<vmem>>, %arg3: memref<1x64xf32, #tpu.memory_space<vmem>>, %arg4: memref<64x128xbf16, #tpu.memory_space<vmem>>, %arg5: memref<1x128xf32, #tpu.memory_space<vmem>>, %arg6: memref<24x128xf32, #tpu.memory_space<vmem>>) attributes {dimension_semantics = [#tpu.dimension_semantics<parallel>], iteration_bounds = array<i64: 1>, scalar_prefetch = 0 : i64, scratch_operands = 0 : i64, tpu.core_type = #tpu.core_type<tc>, window_params = [{transform_indices = @transform_0, window_bounds = array<i64: 24, 32>}, {pipeline_mode = #tpu.pipeline_mode<synchronous>, transform_indices = @transform_1, window_bounds = array<i64: 32, 64>}, {pipeline_mode = #tpu.pipeline_mode<synchronous>, transform_indices = @transform_2, window_bounds = array<i64: 1, 64>}, {pipeline_mode = #tpu.pipeline_mode<synchronous>, transform_indices = @transform_3, window_bounds = array<i64: 64, 128>}, {pipeline_mode = #tpu.pipeline_mode<synchronous>, transform_indices = @transform_4, window_bounds = array<i64: 1, 128>}, {transform_indices = @transform_5, window_bounds = array<i64: 24, 128>}]} {
    %c0 = arith.constant 0 : index
    %c0_0 = arith.constant 0 : index
    %0 = vector.load %arg1[%c0, %c0_0] : memref<24x32xbf16, #tpu.memory_space<vmem>>, vector<24x32xbf16>
    %c0_1 = arith.constant 0 : index
    %c0_2 = arith.constant 0 : index
    %1 = vector.load %arg2[%c0_1, %c0_2] : memref<32x64xbf16, #tpu.memory_space<vmem>>, vector<32x64xbf16>
    %cst = arith.constant dense<0.000000e+00> : vector<24x64xf32>
    %2 = tpu.matmul %0, %1, %cst {dimension_numbers = #tpu.dot_dimension_numbers<[1], [0], [0], [1], [0, 0, 1, 1], [], []>} : vector<24x32xbf16>, vector<32x64xbf16>, vector<24x64xf32> -> vector<24x64xf32>
    %c0_3 = arith.constant 0 : index
    %c0_4 = arith.constant 0 : index
    %3 = vector.load %arg3[%c0_3, %c0_4] : memref<1x64xf32, #tpu.memory_space<vmem>>, vector<1x64xf32>
    %4 = vector.broadcast %3 : vector<1x64xf32> to vector<24x64xf32>
    %5 = arith.addf %2, %4 : vector<24x64xf32>
    %cst_5 = arith.constant 0.000000e+00 : f32
    %6 = vector.broadcast %cst_5 : f32 to vector<24x64xf32>
    %7 = arith.maximumf %5, %6 : vector<24x64xf32>
    %8 = arith.truncf %7 : vector<24x64xf32> to vector<24x64xbf16>
    %c0_6 = arith.constant 0 : index
    %c0_7 = arith.constant 0 : index
    %9 = vector.load %arg4[%c0_6, %c0_7] : memref<64x128xbf16, #tpu.memory_space<vmem>>, vector<64x128xbf16>
    %cst_8 = arith.constant dense<0.000000e+00> : vector<24x128xf32>
    %10 = tpu.matmul %8, %9, %cst_8 {dimension_numbers = #tpu.dot_dimension_numbers<[1], [0], [0], [1], [0, 0, 1, 1], [], []>} : vector<24x64xbf16>, vector<64x128xbf16>, vector<24x128xf32> -> vector<24x128xf32>
    %c0_9 = arith.constant 0 : index
    %c0_10 = arith.constant 0 : index
    %11 = vector.load %arg5[%c0_9, %c0_10] : memref<1x128xf32, #tpu.memory_space<vmem>>, vector<1x128xf32>
    %12 = vector.broadcast %11 : vector<1x128xf32> to vector<24x128xf32>
    %13 = arith.addf %10, %12 : vector<24x128xf32>
    %cst_11 = arith.constant dense<0xFF800000> : vector<24xf32>
    %14 = vector.multi_reduction <maximumf>, %13, %cst_11 [1] : vector<24x128xf32> to vector<24xf32>
    %15 = vector.shape_cast %14 : vector<24xf32> to vector<24x1xf32>
    %16 = vector.broadcast %15 : vector<24x1xf32> to vector<24x128xf32>
    %17 = arith.subf %13, %16 : vector<24x128xf32>
    %18 = math.exp %17 : vector<24x128xf32>
    %cst_12 = arith.constant dense<0.000000e+00> : vector<24xf32>
    %19 = vector.multi_reduction <add>, %18, %cst_12 [1] : vector<24x128xf32> to vector<24xf32>
    %20 = vector.shape_cast %19 : vector<24xf32> to vector<24x1xf32>
    %21 = math.log %20 : vector<24x1xf32>
    %22 = vector.broadcast %21 : vector<24x1xf32> to vector<24x128xf32>
    %23 = arith.subf %17, %22 : vector<24x128xf32>
    %c0_13 = arith.constant 0 : index
    %c0_14 = arith.constant 0 : index
    %24 = vector.load %arg6[%c0_13, %c0_14] : memref<24x128xf32, #tpu.memory_space<vmem>>, vector<24x128xf32>
    tpu.vector_store %arg6[%c0_13, %c0_14], %23 {strides = array<i32>} : memref<24x128xf32, #tpu.memory_space<vmem>>, vector<24x128xf32>,
    return
  }
  func.func @transform_0(%arg0: i32) -> (i32, i32) {
    %c0_i32 = arith.constant 0 : i32
    %c0_i32_0 = arith.constant 0 : i32
    return %arg0, %c0_i32 : i32, i32
  }
  func.func @transform_1(%arg0: i32) -> (i32, i32) {
    %c0_i32 = arith.constant 0 : i32
    %c0_i32_0 = arith.constant 0 : i32
    %c0_i32_1 = arith.constant 0 : i32
    return %c0_i32, %c0_i32_0 : i32, i32
  }
  func.func @transform_2(%arg0: i32) -> (i32, i32) {
    %c0_i32 = arith.constant 0 : i32
    %c0_i32_0 = arith.constant 0 : i32
    %c0_i32_1 = arith.constant 0 : i32
    return %c0_i32, %c0_i32_0 : i32, i32
  }
  func.func @transform_3(%arg0: i32) -> (i32, i32) {
    %c0_i32 = arith.constant 0 : i32
    %c0_i32_0 = arith.constant 0 : i32
    %c0_i32_1 = arith.constant 0 : i32
    return %c0_i32, %c0_i32_0 : i32, i32
  }
  func.func @transform_4(%arg0: i32) -> (i32, i32) {
    %c0_i32 = arith.constant 0 : i32
    %c0_i32_0 = arith.constant 0 : i32
    %c0_i32_1 = arith.constant 0 : i32
    return %c0_i32, %c0_i32_0 : i32, i32
  }
  func.func @transform_5(%arg0: i32) -> (i32, i32) {
    %c0_i32 = arith.constant 0 : i32
    %c0_i32_0 = arith.constant 0 : i32
    return %arg0, %c0_i32 : i32, i32
  }
}

</mosaic_0001>

<llo_original>
// kernel: tpu_custom_call.1
$region0: #{tpu_custom_call.1}
  #allocation0 [shape = 'u32[]', space=smem, size = 0x4, offset = 0x4, fixed_abs, tag = 'smem constant byte address 0x4 - core index']
  #allocation1 [shape = 'u32[144,128]{1,0:T(1,128)}', space=vmem, size = 0x12000, scoped, tag = 'internal scratch']
  %s0 = inlined_call_operand.hbm [shape: bf16[24,32], index: 0, kind: input, shape index: {}]
  %s1 = inlined_call_operand.hbm [shape: bf16[32,64], index: 1, kind: input, shape index: {}]
  %s2 = inlined_call_operand.vmem [shape: f32[1,64], index: 2, kind: input, shape index: {}]
  %s3 = inlined_call_operand.hbm [shape: bf16[64,128], index: 3, kind: input, shape index: {}]
  %s4 = inlined_call_operand.vmem [shape: f32[1,128], index: 4, kind: input, shape index: {}]
  %s5 = inlined_call_operand.hbm [shape: f32[24,128], index: 5, kind: output, shape index: {}]
  %s6 = sld [smem:[#allocation0]]
  $region42: #{tpu_custom_call.1} parent=0
    _
  %s8 = ssub.s32 1, %s6
  %s9 = scalar_select 0, %s8, %s6
  $region1: #{tpu_custom_call.1} parent=0
    #allocation2 [shape = 'u8[6144]{0}', space=vmem, size = 0x1800, scoped, tag = 'input window, operand 0, single buffered']
    #allocation3 [shape = 's32[1]{0}', space=sflag, size = 0x4, scoped, tag = 'scoped memory for tpu_custom_call.1']
    #allocation4 [shape = 's32[1]{0}', space=sflag, size = 0x4, scoped, tag = 'scoped memory for tpu_custom_call.1']
    #allocation5 [shape = 'u8[8192]{0}', space=vmem, size = 0x2000, scoped, tag = 'input window, operand 1, single buffered']
    #allocation6 [shape = 's32[1]{0}', space=sflag, size = 0x4, scoped, tag = 'scoped memory for tpu_custom_call.1']
    #allocation7 [shape = 'u8[16384]{0}', space=vmem, size = 0x4000, scoped, tag = 'input window, operand 3, single buffered']
    #allocation8 [shape = 'u8[12288]{0}', space=vmem, size = 0x3000, scoped, tag = 'output window, operand 0, single buffered']
    %10 = vsyncpa [#allocation3], 0
    %11 = vsyncpa [#allocation6], 0
    %12 = vsyncpa [#allocation4], 0
    // Predicated region
    $region2: #{tpu_custom_call.1} parent=1 // pred_check
      _
    $region3: #{tpu_custom_call.1} parent=1 // pred_check_branch
      %14 = sbr.rel (0) target = $region5
    $region4: #{tpu_custom_call.1} parent=1 // pred_region
      %s16 = ssub.s32 192, 192
      %17 = vsyncadd [#allocation3], %s16
      %s18 = sshll.u32 [#allocation2], 4
      %s19 = int_to_ptr.vmem [resolvable:$true] %s18
      %24 = dma.hbm_to_vmem [thread:$0]  %s0, 192, %s19, [#allocation3], 64, 64, 4
    $region5: #{tpu_custom_call.1} parent=1 // pred_fallthru
      _
    // Predicated region
    $region6: #{tpu_custom_call.1} parent=1 // pred_check
      _
    $region7: #{tpu_custom_call.1} parent=1 // pred_check_branch
      %26 = sbr.rel (0) target = $region9
    $region8: #{tpu_custom_call.1} parent=1 // pred_region
      %s28 = ssub.s32 256, 256
      %29 = vsyncadd [#allocation6], %s28
      %s30 = sshll.u32 [#allocation5], 4
      %s31 = int_to_ptr.vmem [resolvable:$true] %s30
      %36 = dma.hbm_to_vmem [thread:$0]  %s1, 256, %s31, [#allocation6], 64, 64, 4
    $region9: #{tpu_custom_call.1} parent=1 // pred_fallthru
      _
    // Predicated region
    $region10: #{tpu_custom_call.1} parent=1 // pred_check
      _
    $region11: #{tpu_custom_call.1} parent=1 // pred_check_branch
      %38 = sbr.rel (0) target = $region13
    $region12: #{tpu_custom_call.1} parent=1 // pred_region
      _
    $region13: #{tpu_custom_call.1} parent=1 // pred_fallthru
      _
    // Predicated region
    $region14: #{tpu_custom_call.1} parent=1 // pred_check
      _
    $region15: #{tpu_custom_call.1} parent=1 // pred_check_branch
      %40 = sbr.rel (0) target = $region17
    $region16: #{tpu_custom_call.1} parent=1 // pred_region
      %s42 = ssub.s32 512, 512
      %43 = vsyncadd [#allocation6], %s42
      %s44 = sshll.u32 [#allocation7], 4
      %s45 = int_to_ptr.vmem [resolvable:$true] %s44
      %50 = dma.hbm_to_vmem [thread:$0]  %s3, 512, %s45, [#allocation6], 64, 64, 4
    $region17: #{tpu_custom_call.1} parent=1 // pred_fallthru
      _
    // Predicated region
    $region18: #{tpu_custom_call.1} parent=1 // pred_check
      _
    $region19: #{tpu_custom_call.1} parent=1 // pred_check_branch
      %52 = sbr.rel (0) target = $region21
    $region20: #{tpu_custom_call.1} parent=1 // pred_region
      _
    $region21: #{tpu_custom_call.1} parent=1 // pred_fallthru
      _
    // Predicated region
    $region22: #{tpu_custom_call.1} parent=1 // pred_check
      _
    $region23: #{tpu_custom_call.1} parent=1 // pred_check_branch
      %54 = sbr.rel (0) target = $region25
    $region24: #{tpu_custom_call.1} parent=1 // pred_region
      %55 = dma.done [#allocation3], 192
    $region25: #{tpu_custom_call.1} parent=1 // pred_fallthru
      _
    // Predicated region
    $region26: #{tpu_custom_call.1} parent=1 // pred_check
      _
    $region27: #{tpu_custom_call.1} parent=1 // pred_check_branch
      %57 = sbr.rel (0) target = $region29
    $region28: #{tpu_custom_call.1} parent=1 // pred_region
      %58 = dma.done [#allocation6], 256
    $region29: #{tpu_custom_call.1} parent=1 // pred_fallthru
      _
    // Predicated region
    $region30: #{tpu_custom_call.1} parent=1 // pred_check
      _
    $region31: #{tpu_custom_call.1} parent=1 // pred_check_branch
      %60 = sbr.rel (0) target = $region33
    $region32: #{tpu_custom_call.1} parent=1 // pred_region
      %61 = dma.done [#allocation6], 512
    $region33: #{tpu_custom_call.1} parent=1 // pred_fallthru
      _
    %v63 = vld [vmem:[#allocation2] sm:$0xf]
    %v64 = vld [vmem:[#allocation2 + $0x4] sm:$0xf]
    %v65 = vld [vmem:[#allocation2 + $0x8] sm:$0xf]
    %v66 = vld [vmem:[#allocation5] sm:$0xf]
    %v67 = vld [vmem:[#allocation5 + $0x4] sm:$0xf]
    %v68 = vld [vmem:[#allocation5 + $0x8] sm:$0xf]
    %v69 = vld [vmem:[#allocation5 + $0xc] sm:$0xf]
    %v70 = vld [vmem:[%s2] sm:$0x1]
    %v72 = vlaneseq
    %v73 = vshrl.u32 %v72, 7
    %v74 = vsub.s32 0, %v73
    %v75 = vrot.slane %v70, %v74
    %v80 = vunpack.c.l.b16 %v63
    %v81 = vunpack.c.l.b16 %v64
    %v82 = vunpack.c.l.b16 %v65
    %v83 = vpack.c.b16 %v81, %v80
    %v84 = vpack.c.b16 %v82, %v82
    %v89 = vunpack.c.l.b16 %v66
    %v90 = vunpack.c.l.b16 %v67
    %v91 = vunpack.c.l.b16 %v68
    %v92 = vunpack.c.l.b16 %v69
    %v93 = vpack.c.b16 %v90, %v89
    %v94 = vpack.c.b16 %v92, %v91
    %vm97 = vcmask 261120
    %v99 = vsel %vm97, %v83, 0
    %v102 = vsel %vm97, %v84, 0
    %104 = vmatprep.subr.bf16.mxu0 0
    %105 = vmatpush1.bf16.msra.mxu0 0
    %106 = vmatprep.subr.bf16.mxu0 0
    %107 = vmatpush1.bf16.msra.mxu0 0
    %108 = vmatprep.subr.bf16.mxu0 0
    %109 = vmatpush1.bf16.msra.mxu0 0
    %110 = vmatprep.subr.bf16.mxu0 0
    %111 = vmatpush1.bf16.msra.mxu0 0
    %112 = vmatprep.subr.bf16.mxu0 0
    %113 = vmatpush1.bf16.msra.mxu0 0
    %114 = vmatprep.subr.bf16.mxu0 0
    %115 = vmatpush1.bf16.msra.mxu0 0
    %116 = vmatprep.subr.bf16.mxu0 0
    %117 = vmatpush1.bf16.msra.mxu0 %v94
    %118 = vmatprep.subr.bf16.mxu0 0
    %119 = vmatpush1.bf16.msra.mxu0 %v93
    %120 = vmatprep.subr.bf16.mxu0 0
    %121 = vmatpush2.bf16.msra.mxu0 0
    %122 = vmatprep.subr.bf16.mxu0 0
    %123 = vmatpush2.bf16.msra.mxu0 0
    %124 = vmatprep.subr.bf16.mxu0 0
    %125 = vmatpush2.bf16.msra.mxu0 0
    %126 = vmatprep.subr.bf16.mxu0 0
    %127 = vmatpush2.bf16.msra.mxu0 0
    %128 = vmatprep.subr.bf16.mxu0 0
    %129 = vmatpush2.bf16.msra.mxu0 0
    %130 = vmatprep.subr.bf16.mxu0 0
    %131 = vmatpush2.bf16.msra.mxu0 0
    %132 = vmatprep.subr.bf16.mxu0 0
    %133 = vmatpush2.bf16.msra.mxu0 0
    %134 = vmatprep.subr.bf16.mxu0 0
    %135 = vmatpush2.bf16.msra.mxu0 0
    %136 = vmatprep.mubr.bf16.mxu0 0
    %137 = vmatmul.mubr.bf16.gmra.mxu0 %v99
    %v138 = vpop.f32.mrf.mxu0
    %v139 = vadd.f32 %v75, %v138
    %v140 = vpop.f32.mrf.mxu0
    %v141 = vpop.f32.mrf.mxu0
    %v142 = vadd.f32 %v75, %v141
    %v143 = vpop.f32.mrf.mxu0
    %144 = vmatprep.mubr.bf16.mxu0 0
    %145 = vmatmul.mubr.bf16.gmra.mxu0 %v102
    %v146 = vpop.f32.mrf.mxu0
    %v147 = vadd.f32 %v75, %v146
    %v148 = vpop.f32.mrf.mxu0
    %v149 = vpop.f32.mrf.mxu0
    %v150 = vpop.f32.mrf.mxu0
    %151 = vdwg.mxu0
    %v152 = vmax.f32 %v139, 0.0
    %v153 = vmax.f32 %v142, 0.0
    %v154 = vmax.f32 %v147, 0.0
    %v155 = vpack.c.bf16 %v153, %v152
    %v156 = vpack.c.bf16 %v154, %v154
    %v157 = vld [vmem:[#allocation7] sm:$0xf]
    %v158 = vld [vmem:[#allocation7 + $0x4] sm:$0xf]
    %v159 = vld [vmem:[#allocation7 + $0x8] sm:$0xf]
    %v160 = vld [vmem:[#allocation7 + $0xc] sm:$0xf]
    %v161 = vld [vmem:[#allocation7 + $0x10] sm:$0xf]
    %v162 = vld [vmem:[#allocation7 + $0x14] sm:$0xf]
    %v163 = vld [vmem:[#allocation7 + $0x18] sm:$0xf]
    %v164 = vld [vmem:[#allocation7 + $0x1c] sm:$0xf]
    %v165 = vld [vmem:[%s4] sm:$0x1]
    %v167 = vlaneseq
    %v168 = vshrl.u32 %v167, 7
    %v169 = vsub.s32 0, %v168
    %v170 = vrot.slane %v165, %v169
    %v180 = vunpack.c.l.b16 %v157
    %v181 = vunpack.c.l.b16 %v158
    %v182 = vunpack.c.l.b16 %v159
    %v183 = vunpack.c.l.b16 %v160
    %v184 = vunpack.c.l.b16 %v161
    %v185 = vunpack.c.l.b16 %v162
    %v186 = vunpack.c.l.b16 %v163
    %v187 = vunpack.c.l.b16 %v164
    %v188 = vpack.c.b16 %v181, %v180
    %v189 = vpack.c.b16 %v183, %v182
    %v190 = vpack.c.b16 %v185, %v184
    %v191 = vpack.c.b16 %v187, %v186
    %vm196 = vcmask 523264
    %v198 = vsel %vm196, %v155, 0
    %v201 = vsel %vm196, %v156, 0
    %203 = vmatprep.subr.bf16.mxu0 0
    %204 = vmatpush1.bf16.msra.mxu0 0
    %205 = vmatprep.subr.bf16.mxu0 0
    %206 = vmatpush1.bf16.msra.mxu0 0
    %207 = vmatprep.subr.bf16.mxu0 0
    %208 = vmatpush1.bf16.msra.mxu0 0
    %209 = vmatprep.subr.bf16.mxu0 0
    %210 = vmatpush1.bf16.msra.mxu0 0
    %211 = vmatprep.subr.bf16.mxu0 0
    %212 = vmatpush1.bf16.msra.mxu0 %v191
    %213 = vmatprep.subr.bf16.mxu0 0
    %214 = vmatpush1.bf16.msra.mxu0 %v190
    %215 = vmatprep.subr.bf16.mxu0 0
    %216 = vmatpush1.bf16.msra.mxu0 %v189
    %217 = vmatprep.subr.bf16.mxu0 0
    %218 = vmatpush1.bf16.msra.mxu0 %v188
    %219 = vmatprep.subr.bf16.mxu0 0
    %220 = vmatpush2.bf16.msra.mxu0 0
    %221 = vmatprep.subr.bf16.mxu0 0
    %222 = vmatpush2.bf16.msra.mxu0 0
    %223 = vmatprep.subr.bf16.mxu0 0
    %224 = vmatpush2.bf16.msra.mxu0 0
    %225 = vmatprep.subr.bf16.mxu0 0
    %226 = vmatpush2.bf16.msra.mxu0 0
    %227 = vmatprep.subr.bf16.mxu0 0
    %228 = vmatpush2.bf16.msra.mxu0 0
    %229 = vmatprep.subr.bf16.mxu0 0
    %230 = vmatpush2.bf16.msra.mxu0 0
    %231 = vmatprep.subr.bf16.mxu0 0
    %232 = vmatpush2.bf16.msra.mxu0 0
    %233 = vmatprep.subr.bf16.mxu0 0
    %234 = vmatpush2.bf16.msra.mxu0 0
    %235 = vmatprep.mubr.bf16.mxu0 0
    %236 = vmatmul.mubr.bf16.gmra.mxu0 %v198
    %v237 = vpop.f32.mrf.mxu0
    %v238 = vadd.f32 %v170, %v237
    %v239 = vpop.f32.mrf.mxu0
    %v240 = vpop.f32.mrf.mxu0
    %v241 = vadd.f32 %v170, %v240
    %v242 = vpop.f32.mrf.mxu0
    %243 = vmatprep.mubr.bf16.mxu0 0
    %244 = vmatmul.mubr.bf16.gmra.mxu0 %v201
    %v245 = vpop.f32.mrf.mxu0
    %v246 = vadd.f32 %v170, %v245
    %v247 = vpop.f32.mrf.mxu0
    %v248 = vpop.f32.mrf.mxu0
    %v249 = vpop.f32.mrf.mxu0
    %250 = vdwg.mxu0
    %251 = vmax.xlane.f32.xlu0 %v238
    %v252 = vpop.xlane.xlu0 %251
    %253 = vmax.xlane.f32.xlu0 %v241
    %v254 = vpop.xlane.xlu0 %253
    %255 = vmax.xlane.f32.xlu0 %v246
    %v256 = vpop.xlane.xlu0 %255
    %v257 = vsub.f32 %v238, %v252
    %v258 = vsub.f32 %v241, %v254
    %v259 = vsub.f32 %v246, %v256
    %v260 = vmul.f32 %v257, 1.442695
    %v261 = vpow.pop %v260
    %v262 = vmul.f32 %v258, 1.442695
    %v263 = vpow.pop %v262
    %v264 = vmul.f32 %v259, 1.442695
    %v265 = vpow.pop %v264
    %266 = vadd.xlane.f32.xlu0 %v261
    %v267 = vpop.xlane.xlu0 %266
    %268 = vadd.xlane.f32.xlu0 %v263
    %v269 = vpop.xlane.xlu0 %268
    %270 = vadd.xlane.f32.xlu0 %v265
    %v271 = vpop.xlane.xlu0 %270
    %v272 = vlog2.pop %v267
    %v273 = vmul.f32 %v272, 0.6931472
    %v274 = vlog2.pop %v269
    %v275 = vmul.f32 %v274, 0.6931472
    %v276 = vlog2.pop %v271
    %v277 = vmul.f32 %v276, 0.6931472
    %v278 = vsub.f32 %v257, %v273
    %v279 = vsub.f32 %v258, %v275
    %v280 = vsub.f32 %v259, %v277
    %281 = vst [vmem:[#allocation8] sm:$0xff] %v278
    %282 = vst [vmem:[#allocation8 + $0x8] sm:$0xff] %v279
    %283 = vst [vmem:[#allocation8 + $0x10] sm:$0xff] %v280
    // Predicated region
    $region34: #{tpu_custom_call.1} parent=1 // pred_check
      _
    $region35: #{tpu_custom_call.1} parent=1 // pred_check_branch
      %285 = sbr.rel (0) target = $region37
    $region36: #{tpu_custom_call.1} parent=1 // pred_region
      %s287 = ssub.s32 384, 384
      %288 = vsyncadd [#allocation4], %s287
      %s289 = sshll.u32 [#allocation8], 4
      %s290 = int_to_ptr.vmem [resolvable:$true] %s289
      %295 = dma.vmem_to_hbm [thread:$0]  %s290, 384, %s5, [#allocation4], 128, 128, 8
    $region37: #{tpu_custom_call.1} parent=1 // pred_fallthru
      _
    // Predicated region
    $region38: #{tpu_custom_call.1} parent=1 // pred_check
      _
    $region39: #{tpu_custom_call.1} parent=1 // pred_check_branch
      %297 = sbr.rel (0) target = $region41
    $region40: #{tpu_custom_call.1} parent=1 // pred_region
      %298 = dma.done [#allocation4], 384
    $region41: #{tpu_custom_call.1} parent=1 // pred_fallthru
      _
    %299 = vsyncpa [#allocation3], 1
    %300 = vsyncpa [#allocation6], 1
    %301 = vsyncpa [#allocation4], 1

</llo_original>
